<compile_context>
chip_gen: v5e
topology: v5e:2x2
jax: 0.10.0
libtpu: 0.0.40
codegen_flags: <defaults>
</compile_context>

<pallas_src>
import jax
import jax.numpy as jnp
from jax.experimental import pallas as pl
from jax.experimental.pallas import tpu as pltpu


def _add_pos_kernel(x_ref, pos_ref, o_ref):
    # x_ref: (B, TL)   pos_ref: (1, TL)  -> broadcast over the batch (sublane) axis.
    o_ref[...] = x_ref[...] + pos_ref[...]


# ~2 MiB per x/out block => ~<=10 MiB total with double buffering of x/pos/out.
_MAX_BLOCK_BYTES = 2 * 1024 * 1024


def _choose_lane_tile(lane_total: int, rows: int, itemsize: int, max_block_bytes: int) -> int:
    """Largest lane tile that (a) divides lane_total, (b) is a multiple of 128,
    and (c) keeps an x/out block under `max_block_bytes`. Falls back to the
    full lane extent when lane_total is not 128-aligned (full-extent blocks
    are always legal)."""
    if lane_total % 128 != 0:
        return lane_total
    tl = lane_total
    while tl * rows * itemsize > max_block_bytes and tl % 256 == 0:
        tl //= 2
    return tl


def learnable_positional_encoding(
    x: jax.Array, pos_emb: jax.Array, *, max_block_bytes: int = _MAX_BLOCK_BYTES
) -> jax.Array:
    """out = x + pos_emb[:, :S, :]  (broadcast over batch).

    Args:
      x:       (B, S, D) input.
      pos_emb: (1, max_len, D) learnable positional embeddings.
    """
    B, S, D = x.shape
    assert pos_emb.shape[0] == 1 and pos_emb.shape[2] == D
    max_len = pos_emb.shape[1]
    assert S <= max_len, "seq_len exceeds max_len"

    if pos_emb.dtype != x.dtype:
        pos_emb = pos_emb.astype(x.dtype)

    # Lane-dense view: last two dims flattened into one lane axis (free reshape).
    lane_total = S * D
    x2 = x.reshape(B, lane_total)
    pos2 = pos_emb.reshape(1, max_len * D)

    itemsize = jnp.dtype(x.dtype).itemsize
    tl = _choose_lane_tile(lane_total, B, itemsize, max_block_bytes)

    if lane_total % 128 != 0 and S != max_len:
        # Rare odd-shape fallback: a partial non-128-aligned lane block on pos
        # would be illegal, so materialize the slice once so the block equals
        # the full array extent.
        pos2 = pos2[:, :lane_total]

    grid = (lane_total // tl,)

    out2 = pl.pallas_call(
        _add_pos_kernel,
        out_shape=jax.ShapeDtypeStruct((B, lane_total), x.dtype),
        grid_spec=pltpu.PrefetchScalarGridSpec(
            num_scalar_prefetch=0,
            grid=grid,
            in_specs=[
                # x: full batch (sublane axis), one lane tile per grid step.
                pl.BlockSpec((B, tl), lambda t: (0, t)),
                # pos: same lane tile, row 0; only the first S*D lanes of the
                # (unsliced) embedding table are ever addressed.
                pl.BlockSpec((1, tl), lambda t: (0, t)),
            ],
            out_specs=pl.BlockSpec((B, tl), lambda t: (0, t)),
        ),
        compiler_params=pltpu.CompilerParams(
            dimension_semantics=("parallel",),
        ),
        # NOTE: if callers never reuse `x` after this op, passing
        # input_output_aliases={0: 0} would avoid a second (B, S, D) HBM buffer.
    )(x2, pos2)

    return out2.reshape(B, S, D)


def init_position_embeddings(key, max_len: int, d_model: int, std: float = 0.02,
                             dtype=jnp.float32):
    """Analogue of nn.init.trunc_normal_(std=0.02).

    PyTorch truncates at a=-2, b=2 in *absolute* units (±100σ at std=0.02), so
    sample N(0, std²) truncated at ±2 absolute, i.e. ±(2/std) standard units.
    """
    lo, hi = -2.0 / std, 2.0 / std
    return (std * jax.random.truncated_normal(key, lo, hi, (1, max_len, d_model))).astype(dtype)


if __name__ == "__main__":
    key = jax.random.PRNGKey(0)
    k_x, k_p = jax.random.split(key)

    batch, seq_len, d_model, max_len = 2, 8, 32, 16

    x = jax.random.normal(k_x, (batch, seq_len, d_model), dtype=jnp.float32)
    pos_emb = init_position_embeddings(k_p, max_len, d_model)

    ref = x + pos_emb[:, :seq_len, :]

    # Default tiling (single lane tile at this toy size).
    out = jax.block_until_ready(learnable_positional_encoding(x, pos_emb))
    assert out.shape == (batch, seq_len, d_model)
    assert jnp.allclose(out, ref, atol=1e-6, rtol=1e-6)

    # Force a multi-tile grid (2 lane tiles of 128) to exercise the tiled
    # index_maps at small shape.
    out_tiled = jax.block_until_ready(
        learnable_positional_encoding(x, pos_emb, max_block_bytes=1024)
    )
    assert jnp.allclose(out_tiled, ref, atol=1e-6, rtol=1e-6)

    print("KERNEL_OK")
</pallas_src>

<mosaic_0001>
module attributes {stable_mosaic.version = 11 : i64} {
  func.func @_add_pos_kernel(%arg0: i32, %arg1: memref<2x256xf32, #tpu.memory_space<vmem>>, %arg2: memref<1x256xf32, #tpu.memory_space<vmem>>, %arg3: memref<2x256xf32, #tpu.memory_space<vmem>>) attributes {dimension_semantics = [#tpu.dimension_semantics<parallel>], iteration_bounds = array<i64: 1>, scalar_prefetch = 0 : i64, scratch_operands = 0 : i64, tpu.core_type = #tpu.core_type<tc>, window_params = [{transform_indices = @transform_0, window_bounds = array<i64: 2, 256>}, {transform_indices = @transform_1, window_bounds = array<i64: 1, 256>}, {transform_indices = @transform_2, window_bounds = array<i64: 2, 256>}]} {
    %c0 = arith.constant 0 : index
    %c0_0 = arith.constant 0 : index
    %0 = vector.load %arg1[%c0, %c0_0] : memref<2x256xf32, #tpu.memory_space<vmem>>, vector<2x256xf32>
    %c0_1 = arith.constant 0 : index
    %c0_2 = arith.constant 0 : index
    %1 = vector.load %arg2[%c0_1, %c0_2] : memref<1x256xf32, #tpu.memory_space<vmem>>, vector<1x256xf32>
    %2 = vector.broadcast %1 : vector<1x256xf32> to vector<2x256xf32>
    %3 = arith.addf %0, %2 : vector<2x256xf32>
    %c0_3 = arith.constant 0 : index
    %c0_4 = arith.constant 0 : index
    %4 = vector.load %arg3[%c0_3, %c0_4] : memref<2x256xf32, #tpu.memory_space<vmem>>, vector<2x256xf32>
    tpu.vector_store %arg3[%c0_3, %c0_4], %3 {strides = array<i32>} : memref<2x256xf32, #tpu.memory_space<vmem>>, vector<2x256xf32>,
    return
  }
  func.func @transform_0(%arg0: i32) -> (i32, i32) {
    %c0_i32 = arith.constant 0 : i32
    %c0_i32_0 = arith.constant 0 : i32
    return %c0_i32, %arg0 : i32, i32
  }
  func.func @transform_1(%arg0: i32) -> (i32, i32) {
    %c0_i32 = arith.constant 0 : i32
    %c0_i32_0 = arith.constant 0 : i32
    return %c0_i32, %arg0 : i32, i32
  }
  func.func @transform_2(%arg0: i32) -> (i32, i32) {
    %c0_i32 = arith.constant 0 : i32
    %c0_i32_0 = arith.constant 0 : i32
    return %c0_i32, %arg0 : i32, i32
  }
}

</mosaic_0001>

<llo_original>
// kernel: tpu_custom_call.1
$region0: #{tpu_custom_call.1}
  #allocation0 [shape = 'u32[]', space=smem, size = 0x4, offset = 0x4, fixed_abs, tag = 'smem constant byte address 0x4 - core index']
  #allocation1 [shape = 'u32[72,128]{1,0:T(1,128)}', space=vmem, size = 0x9000, scoped, tag = 'internal scratch']
  %s0 = inlined_call_operand.hbm [shape: f32[2,256], index: 0, kind: input, shape index: {}]
  %s1 = inlined_call_operand.hbm [shape: f32[1,512], index: 1, kind: input, shape index: {}]
  %s2 = inlined_call_operand.hbm [shape: f32[2,256], index: 2, kind: output, shape index: {}]
  %s3 = sld [smem:[#allocation0]]
  $region26: #{tpu_custom_call.1} parent=0
    _
  %s5 = ssub.s32 1, %s3
  %s6 = scalar_select 0, %s5, %s3
  $region1: #{tpu_custom_call.1} parent=0
    #allocation2 [shape = 'u8[2048]{0}', space=vmem, size = 0x800, scoped, tag = 'input window, operand 0, single buffered']
    #allocation3 [shape = 's32[1]{0}', space=sflag, size = 0x4, scoped, tag = 'scoped memory for tpu_custom_call.1']
    #allocation4 [shape = 's32[1]{0}', space=sflag, size = 0x4, scoped, tag = 'scoped memory for tpu_custom_call.1']
    #allocation5 [shape = 'u8[1024]{0}', space=vmem, size = 0x400, scoped, tag = 'input window, operand 1, single buffered']
    #allocation6 [shape = 's32[1]{0}', space=sflag, size = 0x4, scoped, tag = 'scoped memory for tpu_custom_call.1']
    #allocation7 [shape = 'u8[2048]{0}', space=vmem, size = 0x800, scoped, tag = 'output window, operand 0, single buffered']
    %7 = vsyncpa [#allocation3], 0
    %8 = vsyncpa [#allocation6], 0
    %9 = vsyncpa [#allocation4], 0
    // Predicated region
    $region2: #{tpu_custom_call.1} parent=1 // pred_check
      _
    $region3: #{tpu_custom_call.1} parent=1 // pred_check_branch
      %11 = sbr.rel (0) target = $region5
    $region4: #{tpu_custom_call.1} parent=1 // pred_region
      %13 = vsyncadd [#allocation3], 0
      %s15 = sshll.u32 %s0, 4
      %s16 = int_to_ptr.hbm [resolvable:$true] %s15
      %s17 = sshll.u32 [#allocation2], 4
      %s18 = int_to_ptr.vmem [resolvable:$true] %s17
      %20 = dma.hbm_to_vmem [thread:$0]  %s16, 64, %s18, [#allocation3]
    $region5: #{tpu_custom_call.1} parent=1 // pred_fallthru
      _
    // Predicated region
    $region6: #{tpu_custom_call.1} parent=1 // pred_check
      _
    $region7: #{tpu_custom_call.1} parent=1 // pred_check_branch
      %22 = sbr.rel (0) target = $region9
    $region8: #{tpu_custom_call.1} parent=1 // pred_region
      %24 = vsyncadd [#allocation6], 0
      %s26 = sshll.u32 %s1, 4
      %s27 = int_to_ptr.hbm [resolvable:$true] %s26
      %s28 = sshll.u32 [#allocation5], 4
      %s29 = int_to_ptr.vmem [resolvable:$true] %s28
      %31 = dma.hbm_to_vmem [thread:$0]  %s27, 32, %s29, [#allocation6]
    $region9: #{tpu_custom_call.1} parent=1 // pred_fallthru
      _
    // Predicated region
    $region10: #{tpu_custom_call.1} parent=1 // pred_check
      _
    $region11: #{tpu_custom_call.1} parent=1 // pred_check_branch
      %33 = sbr.rel (0) target = $region13
    $region12: #{tpu_custom_call.1} parent=1 // pred_region
      %35 = dma.done [#allocation3], 64
    $region13: #{tpu_custom_call.1} parent=1 // pred_fallthru
      _
    // Predicated region
    $region14: #{tpu_custom_call.1} parent=1 // pred_check
      _
    $region15: #{tpu_custom_call.1} parent=1 // pred_check_branch
      %37 = sbr.rel (0) target = $region17
    $region16: #{tpu_custom_call.1} parent=1 // pred_region
      %39 = dma.done [#allocation6], 32
    $region17: #{tpu_custom_call.1} parent=1 // pred_fallthru
      _
    %v40 = vld [vmem:[#allocation2] sm:$0xf]
    %v41 = vld [vmem:[#allocation5] sm:$0x3]
    %v43 = vperm.slane %v41, 0
    %v44 = vperm.slane %v41, 1
    %v45 = vrot.slane %v44, 6
    %vm46 = vcmask 1041408
    %v47 = vsel %vm46, %v43, %v45
    %v49 = vadd.f32 %v40, %v47
    %50 = vst [vmem:[#allocation7] sm:$0xf] %v49
    // Predicated region
    $region18: #{tpu_custom_call.1} parent=1 // pred_check
      _
    $region19: #{tpu_custom_call.1} parent=1 // pred_check_branch
      %52 = sbr.rel (0) target = $region21
    $region20: #{tpu_custom_call.1} parent=1 // pred_region
      %54 = vsyncadd [#allocation4], 0
      %s56 = sshll.u32 [#allocation7], 4
      %s57 = int_to_ptr.vmem [resolvable:$true] %s56
      %s58 = sshll.u32 %s2, 4
      %s59 = int_to_ptr.hbm [resolvable:$true] %s58
      %61 = dma.vmem_to_hbm [thread:$0]  %s57, 64, %s59, [#allocation4]
    $region21: #{tpu_custom_call.1} parent=1 // pred_fallthru
      _
    // Predicated region
    $region22: #{tpu_custom_call.1} parent=1 // pred_check
      _
    $region23: #{tpu_custom_call.1} parent=1 // pred_check_branch
      %63 = sbr.rel (0) target = $region25
    $region24: #{tpu_custom_call.1} parent=1 // pred_region
      %65 = dma.done [#allocation4], 64
    $region25: #{tpu_custom_call.1} parent=1 // pred_fallthru
      _
    %66 = vsyncpa [#allocation3], 1
    %67 = vsyncpa [#allocation6], 1
    %68 = vsyncpa [#allocation4], 1

</llo_original>
